<compile_context>
chip_gen: v7x
topology: tpu7x:2x2x1
jax: 0.10.0
libtpu: 0.0.40
codegen_flags: <defaults>
</compile_context>

<pallas_src>
import jax
import jax.numpy as jnp
from jax import lax
from jax.experimental import pallas as pl
from jax.experimental.pallas import tpu as pltpu

EPS = 1e-5          # nn.BatchNorm1d default eps
NEG_SLOPE = 0.3     # actvn = leaky_relu(0.3)

# Row layout of the packed (8, H) small-parameter tile.
_ROW_G1, _ROW_B1, _ROW_G2, _ROW_B2, _ROW_W3, _ROW_B3 = 0, 1, 2, 3, 4, 5


# --------------------------------------------------------------------------------------
# Fused Pallas kernel: dense1 -> bn1 -> lrelu -> dense2 -> bn2 -> lrelu -> dense3 -> sigmoid
# --------------------------------------------------------------------------------------
def _router_kernel(x_ref, w1_ref, w2_ref, p_ref, d_ref):
    x = x_ref[...]                                   # (N, D) f32
    inv_n = jnp.float32(1.0 / x.shape[0])            # static 1/N

    # Small parameters: single packed (8, H) VMEM tile, sliced per row.
    g1 = p_ref[_ROW_G1:_ROW_G1 + 1, :]               # (1, H)
    b1 = p_ref[_ROW_B1:_ROW_B1 + 1, :]
    g2 = p_ref[_ROW_G2:_ROW_G2 + 1, :]
    b2 = p_ref[_ROW_B2:_ROW_B2 + 1, :]
    w3 = p_ref[_ROW_W3:_ROW_W3 + 1, :]               # dense3 weight row
    b3 = p_ref[_ROW_B3:_ROW_B3 + 1, 0:1]             # (1, 1) dense3 bias

    def bn_lrelu(h, g, b):
        # Single-pass batch statistics (training-mode BatchNorm, biased variance).
        mu = jnp.sum(h, axis=0, keepdims=True) * inv_n
        ex2 = jnp.sum(h * h, axis=0, keepdims=True) * inv_n
        var = ex2 - mu * mu
        h = (h - mu) * lax.rsqrt(var + EPS) * g + b
        return jnp.where(h >= 0, h, NEG_SLOPE * h)

    # dense1 (bias=False) -> bn1 -> leaky_relu(0.3)
    h = jnp.dot(x, w1_ref[...], preferred_element_type=jnp.float32)     # (N, H)
    h = bn_lrelu(h, g1, b1)

    # dense2 (bias=False) -> bn2 -> leaky_relu(0.3)
    h = jnp.dot(h, w2_ref[...], preferred_element_type=jnp.float32)     # (N, H)
    h = bn_lrelu(h, g2, b2)

    # dense3 (out_features=1, with bias) -> sigmoid.
    # Width-1 output: contract along the lane axis (XLU reduce) instead of pushing a
    # degenerate (H, 1) matmul through the MXU.
    d = jnp.sum(h * w3, axis=1, keepdims=True) + b3                     # (N, 1)
    d_ref[...] = jax.nn.sigmoid(d).astype(d_ref.dtype)


# --------------------------------------------------------------------------------------
# One-time parameter layout: pre-transposed weights + packed small-parameter tile.
# --------------------------------------------------------------------------------------
def pack_router_params(params):
    """PyTorch-layout params -> kernel-layout params (do this ONCE, not per call)."""
    H = params['w1'].shape[0]
    packed = jnp.zeros((8, H), jnp.float32)
    packed = packed.at[_ROW_G1].set(params['g1'])
    packed = packed.at[_ROW_B1].set(params['b1'])
    packed = packed.at[_ROW_G2].set(params['g2'])
    packed = packed.at[_ROW_B2].set(params['b2'])
    packed = packed.at[_ROW_W3].set(params['w3'][0])
    packed = packed.at[_ROW_B3].set(jnp.full((H,), params['b3'][0], jnp.float32))
    return {
        'w1_t': jnp.asarray(params['w1'].T, jnp.float32),   # (D, H)
        'w2_t': jnp.asarray(params['w2'].T, jnp.float32),   # (H, H)
        'packed': packed,                                    # (8, H)
    }


def router_forward(kernel_params, x):
    """x: (N, input_size) -> sigmoid routing score (N, 1)."""
    N, D = x.shape
    w1_t = kernel_params['w1_t']
    w2_t = kernel_params['w2_t']
    packed = kernel_params['packed']
    H = w1_t.shape[1]

    vmem = pl.BlockSpec(memory_space=pltpu.MemorySpace.VMEM)

    flops = 2 * N * D * H + 2 * N * H * H + 2 * N * H + 14 * N * H
    bytes_accessed = 4 * (N * D + D * H + H * H + 8 * H + N)
    transcendentals = N + 4 * H                     # sigmoid + two rsqrt rows

    return pl.pallas_call(
        _router_kernel,
        out_shape=jax.ShapeDtypeStruct((N, 1), jnp.float32),
        in_specs=[vmem, vmem, vmem, vmem],
        out_specs=vmem,
        cost_estimate=pl.CostEstimate(
            flops=flops,
            transcendentals=transcendentals,
            bytes_accessed=bytes_accessed),
    )(x, w1_t, w2_t, packed)


# --------------------------------------------------------------------------------------
# Parameters (deterministic synthetic init, shapes follow the PyTorch __init__)
# --------------------------------------------------------------------------------------
def init_router_params(key, input_size=32, hidden_units=128):
    ks = jax.random.split(key, 8)

    def nrm(k, shape, scale=0.1):
        return scale * jax.random.normal(k, shape, jnp.float32)

    return {
        'w1': nrm(ks[0], (hidden_units, input_size)),   # dense1, bias=False
        'w2': nrm(ks[1], (hidden_units, hidden_units)), # dense2, bias=False
        'w3': nrm(ks[2], (1, hidden_units)),            # dense3
        'b3': nrm(ks[3], (1,)),
        'g1': 1.0 + nrm(ks[4], (hidden_units,)),        # bn1 gamma / beta
        'b1': nrm(ks[5], (hidden_units,)),
        'g2': 1.0 + nrm(ks[6], (hidden_units,)),        # bn2 gamma / beta
        'b2': nrm(ks[7], (hidden_units,)),
    }


# --------------------------------------------------------------------------------------
# Pure-JAX reference for verification
# --------------------------------------------------------------------------------------
def router_reference(params, x):
    def bn(h, g, b):
        mu = jnp.mean(h, axis=0, keepdims=True)
        var = jnp.var(h, axis=0, keepdims=True)          # biased (training mode)
        return (h - mu) / jnp.sqrt(var + EPS) * g[None, :] + b[None, :]

    def leaky(h):
        return jnp.where(h >= 0, h, NEG_SLOPE * h)

    h = jnp.dot(x, params['w1'].T, precision=lax.Precision.HIGHEST)
    h = leaky(bn(h, params['g1'], params['b1']))
    h = jnp.dot(h, params['w2'].T, precision=lax.Precision.HIGHEST)
    h = leaky(bn(h, params['g2'], params['b2']))
    d = jnp.dot(h, params['w3'].T, precision=lax.Precision.HIGHEST) + params['b3'][None, :]
    return jax.nn.sigmoid(d)


if __name__ == "__main__":
    key = jax.random.PRNGKey(0)
    kp, kx = jax.random.split(key)

    input_size, hidden_units, batch = 32, 128, 8
    params = init_router_params(kp, input_size=input_size, hidden_units=hidden_units)
    kernel_params = pack_router_params(params)      # one-time layout change
    x = jax.random.normal(kx, (batch, input_size), jnp.float32)

    out = jax.block_until_ready(router_forward(kernel_params, x))
    assert out.shape == (batch, 1), out.shape

    ref = jax.block_until_ready(router_reference(params, x))
    err = float(jnp.max(jnp.abs(out - ref)))
    assert err < 2e-3, f"max abs error vs reference: {err}"

    print("KERNEL_OK")
</pallas_src>

<mosaic_0001>
module attributes {stable_mosaic.version = 11 : i64} {
  func.func @_router_kernel(%arg0: memref<8x32xf32, #tpu.memory_space<vmem>>, %arg1: memref<32x128xf32, #tpu.memory_space<vmem>>, %arg2: memref<128x128xf32, #tpu.memory_space<vmem>>, %arg3: memref<8x128xf32, #tpu.memory_space<vmem>>, %arg4: memref<8x1xf32, #tpu.memory_space<vmem>>) attributes {dimension_semantics = [], scalar_prefetch = 0 : i64, scratch_operands = 0 : i64, tpu.core_type = #tpu.core_type<tc>} {
    %c0 = arith.constant 0 : index
    %c0_0 = arith.constant 0 : index
    %0 = vector.load %arg0[%c0, %c0_0] : memref<8x32xf32, #tpu.memory_space<vmem>>, vector<8x32xf32>
    %c0_1 = arith.constant 0 : index
    %c0_2 = arith.constant 0 : index
    %1 = vector.load %arg3[%c0_1, %c0_2] : memref<8x128xf32, #tpu.memory_space<vmem>>, vector<1x128xf32>
    %c1 = arith.constant 1 : index
    %c0_3 = arith.constant 0 : index
    %2 = vector.load %arg3[%c1, %c0_3] : memref<8x128xf32, #tpu.memory_space<vmem>>, vector<1x128xf32>
    %c2 = arith.constant 2 : index
    %c0_4 = arith.constant 0 : index
    %3 = vector.load %arg3[%c2, %c0_4] : memref<8x128xf32, #tpu.memory_space<vmem>>, vector<1x128xf32>
    %c3 = arith.constant 3 : index
    %c0_5 = arith.constant 0 : index
    %4 = vector.load %arg3[%c3, %c0_5] : memref<8x128xf32, #tpu.memory_space<vmem>>, vector<1x128xf32>
    %c4 = arith.constant 4 : index
    %c0_6 = arith.constant 0 : index
    %5 = vector.load %arg3[%c4, %c0_6] : memref<8x128xf32, #tpu.memory_space<vmem>>, vector<1x128xf32>
    %c5 = arith.constant 5 : index
    %c0_7 = arith.constant 0 : index
    %6 = vector.load %arg3[%c5, %c0_7] : memref<8x128xf32, #tpu.memory_space<vmem>>, vector<1x1xf32>
    %c0_8 = arith.constant 0 : index
    %c0_9 = arith.constant 0 : index
    %7 = vector.load %arg1[%c0_8, %c0_9] : memref<32x128xf32, #tpu.memory_space<vmem>>, vector<32x128xf32>
    %cst = arith.constant dense<0.000000e+00> : vector<8x128xf32>
    %8 = tpu.matmul %0, %7, %cst {dimension_numbers = #tpu.dot_dimension_numbers<[1], [0], [0], [1], [0, 0, 1, 1], [], []>} : vector<8x32xf32>, vector<32x128xf32>, vector<8x128xf32> -> vector<8x128xf32>
    %cst_10 = arith.constant dense<0.000000e+00> : vector<128xf32>
    %9 = vector.multi_reduction <add>, %8, %cst_10 [0] : vector<8x128xf32> to vector<128xf32>
    %10 = vector.shape_cast %9 : vector<128xf32> to vector<1x128xf32>
    %cst_11 = arith.constant 1.250000e-01 : f32
    %11 = vector.broadcast %cst_11 : f32 to vector<1x128xf32>
    %12 = arith.mulf %10, %11 : vector<1x128xf32>
    %13 = arith.mulf %8, %8 : vector<8x128xf32>
    %cst_12 = arith.constant dense<0.000000e+00> : vector<128xf32>
    %14 = vector.multi_reduction <add>, %13, %cst_12 [0] : vector<8x128xf32> to vector<128xf32>
    %15 = vector.shape_cast %14 : vector<128xf32> to vector<1x128xf32>
    %cst_13 = arith.constant 1.250000e-01 : f32
    %16 = vector.broadcast %cst_13 : f32 to vector<1x128xf32>
    %17 = arith.mulf %15, %16 : vector<1x128xf32>
    %18 = arith.mulf %12, %12 : vector<1x128xf32>
    %19 = arith.subf %17, %18 : vector<1x128xf32>
    %20 = vector.broadcast %12 : vector<1x128xf32> to vector<8x128xf32>
    %21 = arith.subf %8, %20 : vector<8x128xf32>
    %cst_14 = arith.constant 9.99999974E-6 : f32
    %22 = vector.broadcast %cst_14 : f32 to vector<1x128xf32>
    %23 = arith.addf %19, %22 : vector<1x128xf32>
    %24 = math.rsqrt %23 : vector<1x128xf32>
    %25 = vector.broadcast %24 : vector<1x128xf32> to vector<8x128xf32>
    %26 = arith.mulf %21, %25 : vector<8x128xf32>
    %27 = vector.broadcast %1 : vector<1x128xf32> to vector<8x128xf32>
    %28 = arith.mulf %26, %27 : vector<8x128xf32>
    %29 = vector.broadcast %2 : vector<1x128xf32> to vector<8x128xf32>
    %30 = arith.addf %28, %29 : vector<8x128xf32>
    %cst_15 = arith.constant 0.000000e+00 : f32
    %31 = vector.broadcast %cst_15 : f32 to vector<8x128xf32>
    %32 = arith.cmpf oge, %30, %31 : vector<8x128xf32>
    %cst_16 = arith.constant 3.000000e-01 : f32
    %33 = vector.broadcast %cst_16 : f32 to vector<8x128xf32>
    %34 = arith.mulf %33, %30 : vector<8x128xf32>
    %35 = arith.select %32, %30, %34 : vector<8x128xi1>, vector<8x128xf32>
    %c0_17 = arith.constant 0 : index
    %c0_18 = arith.constant 0 : index
    %36 = vector.load %arg2[%c0_17, %c0_18] : memref<128x128xf32, #tpu.memory_space<vmem>>, vector<128x128xf32>
    %cst_19 = arith.constant dense<0.000000e+00> : vector<8x128xf32>
    %37 = tpu.matmul %35, %36, %cst_19 {dimension_numbers = #tpu.dot_dimension_numbers<[1], [0], [0], [1], [0, 0, 1, 1], [], []>} : vector<8x128xf32>, vector<128x128xf32>, vector<8x128xf32> -> vector<8x128xf32>
    %cst_20 = arith.constant dense<0.000000e+00> : vector<128xf32>
    %38 = vector.multi_reduction <add>, %37, %cst_20 [0] : vector<8x128xf32> to vector<128xf32>
    %39 = vector.shape_cast %38 : vector<128xf32> to vector<1x128xf32>
    %cst_21 = arith.constant 1.250000e-01 : f32
    %40 = vector.broadcast %cst_21 : f32 to vector<1x128xf32>
    %41 = arith.mulf %39, %40 : vector<1x128xf32>
    %42 = arith.mulf %37, %37 : vector<8x128xf32>
    %cst_22 = arith.constant dense<0.000000e+00> : vector<128xf32>
    %43 = vector.multi_reduction <add>, %42, %cst_22 [0] : vector<8x128xf32> to vector<128xf32>
    %44 = vector.shape_cast %43 : vector<128xf32> to vector<1x128xf32>
    %cst_23 = arith.constant 1.250000e-01 : f32
    %45 = vector.broadcast %cst_23 : f32 to vector<1x128xf32>
    %46 = arith.mulf %44, %45 : vector<1x128xf32>
    %47 = arith.mulf %41, %41 : vector<1x128xf32>
    %48 = arith.subf %46, %47 : vector<1x128xf32>
    %49 = vector.broadcast %41 : vector<1x128xf32> to vector<8x128xf32>
    %50 = arith.subf %37, %49 : vector<8x128xf32>
    %cst_24 = arith.constant 9.99999974E-6 : f32
    %51 = vector.broadcast %cst_24 : f32 to vector<1x128xf32>
    %52 = arith.addf %48, %51 : vector<1x128xf32>
    %53 = math.rsqrt %52 : vector<1x128xf32>
    %54 = vector.broadcast %53 : vector<1x128xf32> to vector<8x128xf32>
    %55 = arith.mulf %50, %54 : vector<8x128xf32>
    %56 = vector.broadcast %3 : vector<1x128xf32> to vector<8x128xf32>
    %57 = arith.mulf %55, %56 : vector<8x128xf32>
    %58 = vector.broadcast %4 : vector<1x128xf32> to vector<8x128xf32>
    %59 = arith.addf %57, %58 : vector<8x128xf32>
    %cst_25 = arith.constant 0.000000e+00 : f32
    %60 = vector.broadcast %cst_25 : f32 to vector<8x128xf32>
    %61 = arith.cmpf oge, %59, %60 : vector<8x128xf32>
    %cst_26 = arith.constant 3.000000e-01 : f32
    %62 = vector.broadcast %cst_26 : f32 to vector<8x128xf32>
    %63 = arith.mulf %62, %59 : vector<8x128xf32>
    %64 = arith.select %61, %59, %63 : vector<8x128xi1>, vector<8x128xf32>
    %65 = vector.broadcast %5 : vector<1x128xf32> to vector<8x128xf32>
    %66 = arith.mulf %64, %65 : vector<8x128xf32>
    %cst_27 = arith.constant dense<0.000000e+00> : vector<8xf32>
    %67 = vector.multi_reduction <add>, %66, %cst_27 [1] : vector<8x128xf32> to vector<8xf32>
    %68 = vector.shape_cast %67 : vector<8xf32> to vector<8x1xf32>
    %69 = vector.broadcast %6 : vector<1x1xf32> to vector<8x1xf32>
    %70 = arith.addf %68, %69 : vector<8x1xf32>
    %71 = arith.negf %70 : vector<8x1xf32>
    %72 = math.exp %71 : vector<8x1xf32>
    %cst_28 = arith.constant 1.000000e+00 : f32
    %73 = vector.broadcast %cst_28 : f32 to vector<8x1xf32>
    %74 = arith.addf %73, %72 : vector<8x1xf32>
    %75 = arith.divf %73, %74 : vector<8x1xf32>
    %c0_29 = arith.constant 0 : index
    %c0_30 = arith.constant 0 : index
    %76 = vector.load %arg4[%c0_29, %c0_30] : memref<8x1xf32, #tpu.memory_space<vmem>>, vector<8x1xf32>
    tpu.vector_store %arg4[%c0_29, %c0_30], %75 {strides = array<i32>} : memref<8x1xf32, #tpu.memory_space<vmem>>, vector<8x1xf32>,
    return
  }
}

</mosaic_0001>

<llo_original>
// kernel: tpu_custom_call.1
$region0: #{tpu_custom_call.1}
  #allocation0 [shape = 'u32[]', space=smem, size = 0x4, offset = 0x4, fixed_abs, tag = 'smem constant byte address 0x4 - core index']
  #allocation1 [shape = 'u32[144,128]{1,0:T(1,128)}', space=vmem, size = 0x12000, scoped, tag = 'internal scratch']
  %s0 = inlined_call_operand.hbm [shape: f32[8,32], index: 0, kind: input, shape index: {}]
  %s1 = inlined_call_operand.hbm [shape: f32[32,128], index: 1, kind: input, shape index: {}]
  %s2 = inlined_call_operand.hbm [shape: f32[128,128], index: 2, kind: input, shape index: {}]
  %s3 = inlined_call_operand.vmem [shape: f32[8,128], index: 3, kind: input, shape index: {}]
  %s4 = inlined_call_operand.vmem [shape: f32[8,1], index: 4, kind: output, shape index: {}]
  %s5 = sld [smem:[#allocation0]]
  $region38: #{tpu_custom_call.1} parent=0
    _
  %s7 = ssub.s32 1, %s5
  %s8 = scalar_select 0, %s7, %s5
  $region1: #{tpu_custom_call.1} parent=0
    #allocation2 [shape = 'u8[4096]{0}', space=vmem, size = 0x1000, scoped, tag = 'input window, operand 0, single buffered']
    #allocation3 [shape = 's32[1]{0}', space=sflag, size = 0x4, scoped, tag = 'scoped memory for tpu_custom_call.1']
    #allocation4 [shape = 'u8[16384]{0}', space=vmem, size = 0x4000, scoped, tag = 'input window, operand 1, single buffered']
    #allocation5 [shape = 's32[1]{0}', space=sflag, size = 0x4, scoped, tag = 'scoped memory for tpu_custom_call.1']
    #allocation6 [shape = 'u8[65536]{0}', space=vmem, size = 0x10000, scoped, tag = 'input window, operand 2, single buffered']
    %9 = vsyncpa [#allocation3], 0
    %10 = vsyncpa [#allocation5], 0
    // Predicated region
    $region2: #{tpu_custom_call.1} parent=1 // pred_check
      _
    $region3: #{tpu_custom_call.1} parent=1 // pred_check_branch
      %12 = sbr.rel (0) target = $region5
    $region4: #{tpu_custom_call.1} parent=1 // pred_region
      %s14 = ssub.s32 128, 128
      %15 = vsyncadd [#allocation3], %s14
      %s17 = sshll.u32 [#allocation2], 4
      %s18 = int_to_ptr.vmem [resolvable:$true] %s17
      %20 = dma.hbm_to_vmem [thread:$0]  %s0, 128, %s18, [#allocation3]
    $region5: #{tpu_custom_call.1} parent=1 // pred_fallthru
      _
    // Predicated region
    $region6: #{tpu_custom_call.1} parent=1 // pred_check
      _
    $region7: #{tpu_custom_call.1} parent=1 // pred_check_branch
      %22 = sbr.rel (0) target = $region9
    $region8: #{tpu_custom_call.1} parent=1 // pred_region
      %s24 = ssub.s32 512, 512
      %25 = vsyncadd [#allocation5], %s24
      %s26 = sshll.u32 [#allocation4], 4
      %s27 = int_to_ptr.vmem [resolvable:$true] %s26
      %32 = dma.hbm_to_vmem [thread:$0]  %s1, 512, %s27, [#allocation5], 128, 128, 8
    $region9: #{tpu_custom_call.1} parent=1 // pred_fallthru
      _
    // Predicated region
    $region10: #{tpu_custom_call.1} parent=1 // pred_check
      _
    $region11: #{tpu_custom_call.1} parent=1 // pred_check_branch
      %34 = sbr.rel (0) target = $region13
    $region12: #{tpu_custom_call.1} parent=1 // pred_region
      %s36 = ssub.s32 2048, 2048
      %37 = vsyncadd [#allocation5], %s36
      %s38 = sshll.u32 [#allocation6], 4
      %s39 = int_to_ptr.vmem [resolvable:$true] %s38
      %44 = dma.hbm_to_vmem [thread:$0]  %s2, 2048, %s39, [#allocation5], 128, 128, 8
    $region13: #{tpu_custom_call.1} parent=1 // pred_fallthru
      _
    // Predicated region
    $region14: #{tpu_custom_call.1} parent=1 // pred_check
      _
    $region15: #{tpu_custom_call.1} parent=1 // pred_check_branch
      %46 = sbr.rel (0) target = $region17
    $region16: #{tpu_custom_call.1} parent=1 // pred_region
      _
    $region17: #{tpu_custom_call.1} parent=1 // pred_fallthru
      _
    // Predicated region
    $region18: #{tpu_custom_call.1} parent=1 // pred_check
      _
    $region19: #{tpu_custom_call.1} parent=1 // pred_check_branch
      %48 = sbr.rel (0) target = $region21
    $region20: #{tpu_custom_call.1} parent=1 // pred_region
      %49 = dma.done [#allocation3], 128
    $region21: #{tpu_custom_call.1} parent=1 // pred_fallthru
      _
    // Predicated region
    $region22: #{tpu_custom_call.1} parent=1 // pred_check
      _
    $region23: #{tpu_custom_call.1} parent=1 // pred_check_branch
      %51 = sbr.rel (0) target = $region25
    $region24: #{tpu_custom_call.1} parent=1 // pred_region
      %52 = dma.done [#allocation5], 512
    $region25: #{tpu_custom_call.1} parent=1 // pred_fallthru
      _
    // Predicated region
    $region26: #{tpu_custom_call.1} parent=1 // pred_check
      _
    $region27: #{tpu_custom_call.1} parent=1 // pred_check_branch
      %54 = sbr.rel (0) target = $region29
    $region28: #{tpu_custom_call.1} parent=1 // pred_region
      %55 = dma.done [#allocation5], 2048
    $region29: #{tpu_custom_call.1} parent=1 // pred_fallthru
      _
    %v56 = vld [vmem:[#allocation2] sm:$0xff]
    %v57 = vld [vmem:[%s3] sm:$0x1]
    %v58 = vld [vmem:[%s3 + $0x1] sm:$0x1]
    %v59 = vld [vmem:[%s3 + $0x2] sm:$0x1]
    %v60 = vld [vmem:[%s3 + $0x3] sm:$0x1]
    %v61 = vld [vmem:[%s3 + $0x4] sm:$0x1]
    %v62 = vld [vmem:[%s3 + $0x5] sm:$0x1]
    %v63 = vld [vmem:[#allocation4] sm:$0xff]
    %v64 = vld [vmem:[#allocation4 + $0x8] sm:$0xff]
    %v65 = vld [vmem:[#allocation4 + $0x10] sm:$0xff]
    %v66 = vld [vmem:[#allocation4 + $0x18] sm:$0xff]
    %vm67 = vcmask 261120
    %v69 = vsel %vm67, %v56, 0
    %71 = vmatprep.subr.mxu0 0.0
    %72 = vmatpush1.msra.mxu0 %v63
    %73 = vmatprep.subr.mxu0 0.0
    %74 = vmatpush1.msra.mxu0 %v64
    %75 = vmatprep.subr.mxu0 0.0
    %76 = vmatpush1.msra.mxu0 %v65
    %77 = vmatprep.subr.mxu0 0.0
    %78 = vmatpush1.msra.mxu0 %v66
    %79 = vmatprep.subr.mxu0 0.0
    %80 = vmatpush1.msra.mxu0 0.0
    %81 = vmatprep.subr.mxu0 0.0
    %82 = vmatpush1.msra.mxu0 0.0
    %83 = vmatprep.subr.mxu0 0.0
    %84 = vmatpush1.msra.mxu0 0.0
    %85 = vmatprep.subr.mxu0 0.0
    %86 = vmatpush1.msra.mxu0 0.0
    %87 = vmatprep.subr.mxu0 0.0
    %88 = vmatpush1.msra.mxu0 0.0
    %89 = vmatprep.subr.mxu0 0.0
    %90 = vmatpush1.msra.mxu0 0.0
    %91 = vmatprep.subr.mxu0 0.0
    %92 = vmatpush1.msra.mxu0 0.0
    %93 = vmatprep.subr.mxu0 0.0
    %94 = vmatpush1.msra.mxu0 0.0
    %95 = vmatprep.subr.mxu0 0.0
    %96 = vmatpush1.msra.mxu0 0.0
    %97 = vmatprep.subr.mxu0 0.0
    %98 = vmatpush1.msra.mxu0 0.0
    %99 = vmatprep.subr.mxu0 0.0
    %100 = vmatpush1.msra.mxu0 0.0
    %101 = vmatprep.subr.mxu0 0.0
    %102 = vmatpush1.msra.mxu0 0.0
    %103 = vmatprep.subr.mxu0 0.0
    %104 = vmatpush1.msra.mxu0 0.0
    %105 = vmatprep.subr.mxu0 0.0
    %106 = vmatpush1.msra.mxu0 0.0
    %107 = vmatprep.subr.mxu0 0.0
    %108 = vmatpush1.msra.mxu0 0.0
    %109 = vmatprep.subr.mxu0 0.0
    %110 = vmatpush1.msra.mxu0 0.0
    %111 = vmatprep.subr.mxu0 0.0
    %112 = vmatpush1.msra.mxu0 0.0
    %113 = vmatprep.subr.mxu0 0.0
    %114 = vmatpush1.msra.mxu0 0.0
    %115 = vmatprep.subr.mxu0 0.0
    %116 = vmatpush1.msra.mxu0 0.0
    %117 = vmatprep.subr.mxu0 0.0
    %118 = vmatpush1.msra.mxu0 0.0
    %119 = vmatprep.subr.mxu0 0.0
    %120 = vmatpush1.msra.mxu0 0.0
    %121 = vmatprep.subr.mxu0 0.0
    %122 = vmatpush1.msra.mxu0 0.0
    %123 = vmatprep.subr.mxu0 0.0
    %124 = vmatpush1.msra.mxu0 0.0
    %125 = vmatprep.subr.mxu0 0.0
    %126 = vmatpush1.msra.mxu0 0.0
    %127 = vmatprep.subr.mxu0 0.0
    %128 = vmatpush1.msra.mxu0 0.0
    %129 = vmatprep.subr.mxu0 0.0
    %130 = vmatpush1.msra.mxu0 0.0
    %131 = vmatprep.subr.mxu0 0.0
    %132 = vmatpush1.msra.mxu0 0.0
    %133 = vmatprep.subr.mxu0 0.0
    %134 = vmatpush1.msra.mxu0 0.0
    %135 = vmatprep.mubr.f32.mxu0 0.0
    %136 = vmatmul.mubr.f32.gmra.mrb[0].mxu0 %v69
    %v137 = vpop.f32.mrb[0].mxu0
    %v138 = vadd.f32 0.0, %v137
    %v139 = vpop.f32.mrb[0].mxu0
    %140 = vdwg.mxu0
    %v141 = vrot.slane %v138, 4
    %v142 = vadd.f32 %v138, %v141
    %v143 = vrot.slane %v142, 2
    %v144 = vadd.f32 %v142, %v143
    %v145 = vrot.slane %v144, 1
    %v146 = vadd.f32 %v144, %v145
    %v147 = vmul.f32 %v146, 0.125
    %v148 = vmul.f32 %v138, %v138
    %v149 = vrot.slane %v148, 4
    %v150 = vadd.f32 %v148, %v149
    %v151 = vrot.slane %v150, 2
    %v152 = vadd.f32 %v150, %v151
    %v153 = vrot.slane %v152, 1
    %v154 = vadd.f32 %v152, %v153
    %v155 = vmul.f32 %v154, 0.125
    %v156 = vmul.f32 %v147, %v147
    %v157 = vsub.f32 %v155, %v156
    %v158 = vsub.f32 %v138, %v147
    %v159 = vadd.f32 %v157, 1e-05
    %v160 = vrsqrt.pop %v159
    %v161 = vmul.f32 %v158, %v160
    %v162 = vlaneseq
    %v163 = vshrl.u32 %v162, 7
    %v164 = vsub.s32 0, %v163
    %v165 = vrot.slane %v57, %v164
    %v166 = vmul.f32 %v161, %v165
    %v167 = vlaneseq
    %v168 = vshrl.u32 %v167, 7
    %v169 = vsub.s32 0, %v168
    %v170 = vrot.slane %v58, %v169
    %v171 = vadd.f32 %v166, %v170
    %vm172 = vcmp.ge.f32.partialorder %v171, 0.0
    %v173 = vmul.f32 %v171, 0.3
    %v174 = vsel %vm172, %v171, %v173
    %v175 = vld [vmem:[#allocation6] sm:$0xff]
    %v176 = vld [vmem:[#allocation6 + $0x8] sm:$0xff]
    %v177 = vld [vmem:[#allocation6 + $0x10] sm:$0xff]
    %v178 = vld [vmem:[#allocation6 + $0x18] sm:$0xff]
    %v179 = vld [vmem:[#allocation6 + $0x20] sm:$0xff]
    %v180 = vld [vmem:[#allocation6 + $0x28] sm:$0xff]
    %v181 = vld [vmem:[#allocation6 + $0x30] sm:$0xff]
    %v182 = vld [vmem:[#allocation6 + $0x38] sm:$0xff]
    %v183 = vld [vmem:[#allocation6 + $0x40] sm:$0xff]
    %v184 = vld [vmem:[#allocation6 + $0x48] sm:$0xff]
    %v185 = vld [vmem:[#allocation6 + $0x50] sm:$0xff]
    %v186 = vld [vmem:[#allocation6 + $0x58] sm:$0xff]
    %v187 = vld [vmem:[#allocation6 + $0x60] sm:$0xff]
    %v188 = vld [vmem:[#allocation6 + $0x68] sm:$0xff]
    %v189 = vld [vmem:[#allocation6 + $0x70] sm:$0xff]
    %v190 = vld [vmem:[#allocation6 + $0x78] sm:$0xff]
    %191 = vmatprep.subr.mxu0 0.0
    %192 = vmatpush1.msra.mxu0 %v175
    %193 = vmatprep.subr.mxu0 0.0
    %194 = vmatpush1.msra.mxu0 %v176
    %195 = vmatprep.subr.mxu0 0.0
    %196 = vmatpush1.msra.mxu0 %v177
    %197 = vmatprep.subr.mxu0 0.0
    %198 = vmatpush1.msra.mxu0 %v178
    %199 = vmatprep.subr.mxu0 0.0
    %200 = vmatpush1.msra.mxu0 %v179
    %201 = vmatprep.subr.mxu0 0.0
    %202 = vmatpush1.msra.mxu0 %v180
    %203 = vmatprep.subr.mxu0 0.0
    %204 = vmatpush1.msra.mxu0 %v181
    %205 = vmatprep.subr.mxu0 0.0
    %206 = vmatpush1.msra.mxu0 %v182
    %207 = vmatprep.subr.mxu0 0.0
    %208 = vmatpush1.msra.mxu0 %v183
    %209 = vmatprep.subr.mxu0 0.0
    %210 = vmatpush1.msra.mxu0 %v184
    %211 = vmatprep.subr.mxu0 0.0
    %212 = vmatpush1.msra.mxu0 %v185
    %213 = vmatprep.subr.mxu0 0.0
    %214 = vmatpush1.msra.mxu0 %v186
    %215 = vmatprep.subr.mxu0 0.0
    %216 = vmatpush1.msra.mxu0 %v187
    %217 = vmatprep.subr.mxu0 0.0
    %218 = vmatpush1.msra.mxu0 %v188
    %219 = vmatprep.subr.mxu0 0.0
    %220 = vmatpush1.msra.mxu0 %v189
    %221 = vmatprep.subr.mxu0 0.0
    %222 = vmatpush1.msra.mxu0 %v190
    %223 = vmatprep.subr.mxu0 0.0
    %224 = vmatpush1.msra.mxu0 0.0
    %225 = vmatprep.subr.mxu0 0.0
    %226 = vmatpush1.msra.mxu0 0.0
    %227 = vmatprep.subr.mxu0 0.0
    %228 = vmatpush1.msra.mxu0 0.0
    %229 = vmatprep.subr.mxu0 0.0
    %230 = vmatpush1.msra.mxu0 0.0
    %231 = vmatprep.subr.mxu0 0.0
    %232 = vmatpush1.msra.mxu0 0.0
    %233 = vmatprep.subr.mxu0 0.0
    %234 = vmatpush1.msra.mxu0 0.0
    %235 = vmatprep.subr.mxu0 0.0
    %236 = vmatpush1.msra.mxu0 0.0
    %237 = vmatprep.subr.mxu0 0.0
    %238 = vmatpush1.msra.mxu0 0.0
    %239 = vmatprep.subr.mxu0 0.0
    %240 = vmatpush1.msra.mxu0 0.0
    %241 = vmatprep.subr.mxu0 0.0
    %242 = vmatpush1.msra.mxu0 0.0
    %243 = vmatprep.subr.mxu0 0.0
    %244 = vmatpush1.msra.mxu0 0.0
    %245 = vmatprep.subr.mxu0 0.0
    %246 = vmatpush1.msra.mxu0 0.0
    %247 = vmatprep.subr.mxu0 0.0
    %248 = vmatpush1.msra.mxu0 0.0
    %249 = vmatprep.subr.mxu0 0.0
    %250 = vmatpush1.msra.mxu0 0.0
    %251 = vmatprep.subr.mxu0 0.0
    %252 = vmatpush1.msra.mxu0 0.0
    %253 = vmatprep.subr.mxu0 0.0
    %254 = vmatpush1.msra.mxu0 0.0
    %255 = vmatprep.mubr.f32.mxu0 0.0
    %256 = vmatmul.mubr.f32.gmra.mrb[0].mxu0 %v174
    %v257 = vpop.f32.mrb[0].mxu0
    %v258 = vadd.f32 0.0, %v257
    %v259 = vpop.f32.mrb[0].mxu0
    %260 = vdwg.mxu0
    %v261 = vrot.slane %v258, 4
    %v262 = vadd.f32 %v258, %v261
    %v263 = vrot.slane %v262, 2
    %v264 = vadd.f32 %v262, %v263
    %v265 = vrot.slane %v264, 1
    %v266 = vadd.f32 %v264, %v265
    %v267 = vmul.f32 %v266, 0.125
    %v268 = vmul.f32 %v258, %v258
    %v269 = vrot.slane %v268, 4
    %v270 = vadd.f32 %v268, %v269
    %v271 = vrot.slane %v270, 2
    %v272 = vadd.f32 %v270, %v271
    %v273 = vrot.slane %v272, 1
    %v274 = vadd.f32 %v272, %v273
    %v275 = vmul.f32 %v274, 0.125
    %v276 = vmul.f32 %v267, %v267
    %v277 = vsub.f32 %v275, %v276
    %v278 = vsub.f32 %v258, %v267
    %v279 = vadd.f32 %v277, 1e-05
    %v280 = vrsqrt.pop %v279
    %v281 = vmul.f32 %v278, %v280
    %v282 = vlaneseq
    %v283 = vshrl.u32 %v282, 7
    %v284 = vsub.s32 0, %v283
    %v285 = vrot.slane %v59, %v284
    %v286 = vmul.f32 %v281, %v285
    %v287 = vlaneseq
    %v288 = vshrl.u32 %v287, 7
    %v289 = vsub.s32 0, %v288
    %v290 = vrot.slane %v60, %v289
    %v291 = vadd.f32 %v286, %v290
    %vm292 = vcmp.ge.f32.partialorder %v291, 0.0
    %v293 = vmul.f32 %v291, 0.3
    %v294 = vsel %vm292, %v291, %v293
    %v295 = vlaneseq
    %v296 = vshrl.u32 %v295, 7
    %v297 = vsub.s32 0, %v296
    %v298 = vrot.slane %v61, %v297
    %v299 = vmul.f32 %v294, %v298
    %300 = vadd.xlane.f32.xlu0 %v299
    %v301 = vpop.xlane.xlu0 %300
    %v302 = vlaneseq
    %v303 = vshrl.u32 %v302, 7
    %v304 = vsub.s32 0, %v303
    %v305 = vrot.slane %v62, %v304
    %v306 = vadd.f32 %v301, %v305
    %v307 = vxor.u32 %v306, 2147483648
    %v308 = vmul.f32 %v307, 1.442695
    %v309 = vpow.pop %v308
    %v310 = vadd.f32 %v309, 1.0
    %v311 = vrcp.pop %v310
    %v312 = vmul.f32 1.0, %v311
    %vm313 = vcmask 7168
    %314 = vst.msk [vmem:[%s4] sm:$0xff] %vm313, %v312
    // Predicated region
    $region30: #{tpu_custom_call.1} parent=1 // pred_check
      _
    $region31: #{tpu_custom_call.1} parent=1 // pred_check_branch
      %316 = sbr.rel (0) target = $region33
    $region32: #{tpu_custom_call.1} parent=1 // pred_region
      _
    $region33: #{tpu_custom_call.1} parent=1 // pred_fallthru
      _
    // Predicated region
    $region34: #{tpu_custom_call.1} parent=1 // pred_check
      _
    $region35: #{tpu_custom_call.1} parent=1 // pred_check_branch
      %318 = sbr.rel (0) target = $region37
    $region36: #{tpu_custom_call.1} parent=1 // pred_region
      _
    $region37: #{tpu_custom_call.1} parent=1 // pred_fallthru
      _
    %319 = vsyncpa [#allocation3], 1
    %320 = vsyncpa [#allocation5], 1

</llo_original>
